<compile_context>
chip_gen: v6e
topology: v6e:2x2x1
jax: 0.10.0
libtpu: 0.0.40
codegen_flags: <defaults>
</compile_context>

<pallas_src>
import functools

import jax
import jax.numpy as jnp
from jax.experimental import pallas as pl
from jax.experimental.pallas import tpu as pltpu

TEMPERATURE = 0.07
BASE_TEMPERATURE = 0.07


def _round_up(x, m):
    return ((x + m - 1) // m) * m


def _cdiv(a, b):
    return -(-a // b)


def _supcon_kernel(rowf_ref, colf_ref, rgid_ref, cgid_ref, pcnt_ref,   # inputs
                   out_ref,                                            # output [TM, 1]
                   m_ref, l_ref, psum_ref,                             # VMEM scratch
                   *, loss_scale, n_contrast, tm, tn):
    i = pl.program_id(0)   # anchor-row tile (parallel)
    j = pl.program_id(1)   # contrast-column tile (reduction axis, last)

    @pl.when(j == 0)
    def _init():
        m_ref[...] = jnp.full_like(m_ref, -jnp.inf)
        l_ref[...] = jnp.zeros_like(l_ref)
        psum_ref[...] = jnp.zeros_like(psum_ref)

    # Similarity tile on the MXU.  Temperature is already folded into the
    # anchor features in the wrapper; contraction is on the lane (feature)
    # axis of both operands -> no transpose materialized, f32 accumulation.
    s = jax.lax.dot_general(
        rowf_ref[...], colf_ref[...],
        dimension_numbers=(((1,), (1,)), ((), ())),
        preferred_element_type=jnp.float32)                         # [TM, TN] f32

    # Global row/col indices: self-contrast diagonal + padded-column mask,
    # computed once per tile as a single f32 mask (reused for the positives).
    glob_r = i * tm + jax.lax.broadcasted_iota(jnp.int32, (tm, 1), 0)
    glob_c = j * tn + jax.lax.broadcasted_iota(jnp.int32, (1, tn), 1)
    keep_f = jnp.logical_and(glob_r != glob_c,
                             glob_c < n_contrast).astype(jnp.float32)  # [TM, TN]

    # Online logsumexp of the denominator.  NOTE: the running max is taken
    # over ALL columns (self-contrast / padding included) — exactly like the
    # PyTorch `logits_max` — and masked terms are zeroed after the exp.  This
    # keeps m finite from the very first tile (no exp(-inf - -inf) corner).
    m_new = jnp.maximum(m_ref[...], jnp.max(s, axis=1, keepdims=True))
    alpha = jnp.exp(m_ref[...] - m_new)
    e = jnp.exp(s - m_new) * keep_f
    l_ref[...] = alpha * l_ref[...] + jnp.sum(e, axis=1, keepdims=True)
    m_ref[...] = m_new

    # Positive mask recomputed from group ids (never DMA'd as an [N, N] array).
    # Padded columns carry a sentinel gid, so `keep_f` only adds the diagonal
    # exclusion here.
    pos = jnp.where(rgid_ref[...] == cgid_ref[...], keep_f, 0.0)
    psum_ref[...] += jnp.sum(pos * s, axis=1, keepdims=True)

    @pl.when(j == pl.num_programs(1) - 1)
    def _finalize():
        log_denom = m_ref[...] + jnp.log(l_ref[...])
        # NOTE: matches PyTorch semantics — an anchor with zero positives
        # yields NaN (psum/0), exactly like the reference implementation.
        mean_log_prob_pos = psum_ref[...] / pcnt_ref[...] - log_denom
        out_ref[...] = (-loss_scale) * mean_log_prob_pos


def _vmem_estimate_bytes(tm, tn, d_pad, feat_itemsize):
    feat = 2 * (tm + tn) * d_pad * feat_itemsize          # double-buffered feature tiles
    small = 2 * 3 * tm * 128 * 4 + 2 * 8 * tn * 4         # rgid/pcnt/out (lane-padded) + cgid
    scratch = 3 * tm * 128 * 4                             # m / l / psum accumulators
    temps = 4 * tm * tn * 4                                 # live [TM,TN] f32 temporaries
    return feat + small + scratch + temps


def supcon_loss(features, labels=None, mask=None,
                temperature=TEMPERATURE, base_temperature=BASE_TEMPERATURE,
                contrast_mode="all", compute_dtype=jnp.bfloat16,
                block_m=None, block_n=None):
    """JAX/Pallas port of SupConLoss.forward (contrast_mode 'all' and 'one')."""
    if features.ndim < 3:
        raise ValueError("`features` needs to be [bsz, n_views, ...]")
    if features.ndim > 3:
        features = features.reshape(features.shape[0], features.shape[1], -1)
    bsz, n_views, d = features.shape

    if labels is not None and mask is not None:
        raise ValueError("Cannot define both `labels` and `mask`")
    if mask is not None:
        # TODO(synk): arbitrary/asymmetric `mask` needs a tiled [N, N] mask-input
        # path; only labels / None (equality masks) use the in-kernel gid compare.
        raise NotImplementedError("explicit `mask` argument not supported by the "
                                  "Pallas kernel; pass `labels` or neither")
    if labels is None:
        gids = jnp.arange(bsz, dtype=jnp.int32)        # eye(bsz) == index equality
    else:
        labels = jnp.asarray(labels).reshape(-1)
        if labels.shape[0] != bsz:
            raise ValueError("Num of labels does not match num of features")
        gids = labels.astype(jnp.int32)

    contrast_count = n_views
    # torch.cat(torch.unbind(features, 1), 0) -> view-major [n_views*bsz, D]
    contrast_feature = jnp.transpose(features, (1, 0, 2)).reshape(n_views * bsz, d)

    if contrast_mode == "one":
        anchor_feature = features[:, 0, :]
        anchor_count = 1
    elif contrast_mode == "all":
        anchor_feature = contrast_feature
        anchor_count = contrast_count
    else:
        raise ValueError(f"Unknown mode: {contrast_mode}")

    m_rows = anchor_count * bsz        # number of anchors
    n_cols = contrast_count * bsz      # number of contrast samples

    row_gids = jnp.tile(gids, anchor_count)
    col_gids = jnp.tile(gids, contrast_count)

    # Per-anchor positive counts precomputed here (depend only on gids).  The
    # self-contrast column is always excluded, hence the "- 1".
    same_count = (gids[:, None] == gids[None, :]).sum(axis=1).astype(jnp.float32)
    pcnt_per_sample = contrast_count * same_count - 1.0
    row_pcnt = jnp.tile(pcnt_per_sample, anchor_count)

    # ---- Tile-size selection -------------------------------------------------
    # Rows sublane-aligned (8), cols lane-aligned (128), feature dim padded to
    # 128 lanes.  Large TM (contrast reuse) but >=2 row tiles so the parallel
    # axis can shard across v7x's two TensorCores; TN kept moderate.
    feat_itemsize = jnp.dtype(compute_dtype).itemsize
    d_pad = _round_up(d, 128)

    if block_m is not None:
        tm = int(block_m)
    else:
        tm = min(512, max(8, _round_up(_cdiv(m_rows, 4), 8)))
    if block_n is not None:
        tn = int(block_n)
    else:
        tn = min(256, _round_up(n_cols, 128))

    # Keep the per-step working set inside an explicit VMEM budget (shrink TN
    # first to preserve anchor-tile reuse).
    budget = 40 << 20
    if block_m is None and block_n is None:
        while _vmem_estimate_bytes(tm, tn, d_pad, feat_itemsize) > budget:
            if tn > 128:
                tn = max(128, _round_up(tn // 2, 128))
            elif tm > 8:
                tm = max(8, _round_up(tm // 2, 8))
            else:
                break
    assert tm % 8 == 0 and tn % 128 == 0

    m_pad = _round_up(m_rows, tm)
    n_pad = _round_up(n_cols, tn)

    vmem_est = _vmem_estimate_bytes(tm, tn, d_pad, feat_itemsize)
    vmem_limit = int(min(max(32 << 20, 2 * vmem_est), 64 << 20))

    # ---- Padded operands -----------------------------------------------------
    inv_temp = float(1.0 / temperature)
    # Temperature folded into the anchor features here (f32), fused with the
    # pad/cast; the kernel never rescales the [TM, D] tile per column step.
    anchor_scaled = anchor_feature.astype(jnp.float32) * inv_temp
    anchor_p = jnp.zeros((m_pad, d_pad), compute_dtype).at[:m_rows, :d].set(
        anchor_scaled.astype(compute_dtype))
    contrast_p = jnp.zeros((n_pad, d_pad), compute_dtype).at[:n_cols, :d].set(
        contrast_feature.astype(compute_dtype))
    rgid_p = jnp.full((m_pad, 1), -1, jnp.int32).at[:m_rows, 0].set(row_gids)
    cgid_p = jnp.full((1, n_pad), -2, jnp.int32).at[0, :n_cols].set(col_gids)
    pcnt_p = jnp.ones((m_pad, 1), jnp.float32).at[:m_rows, 0].set(row_pcnt)

    kernel = functools.partial(
        _supcon_kernel,
        loss_scale=float(temperature / base_temperature),
        n_contrast=int(n_cols), tm=int(tm), tn=int(tn))

    per_anchor = pl.pallas_call(
        kernel,
        out_shape=jax.ShapeDtypeStruct((m_pad, 1), jnp.float32),
        grid_spec=pltpu.PrefetchScalarGridSpec(
            num_scalar_prefetch=0,
            grid=(m_pad // tm, n_pad // tn),
            in_specs=[
                pl.BlockSpec((tm, d_pad), lambda i, j: (i, 0)),   # anchor rows (resident)
                pl.BlockSpec((tn, d_pad), lambda i, j: (j, 0)),   # contrast cols (streamed)
                pl.BlockSpec((tm, 1), lambda i, j: (i, 0)),       # row group ids
                pl.BlockSpec((1, tn), lambda i, j: (0, j)),       # col group ids
                pl.BlockSpec((tm, 1), lambda i, j: (i, 0)),       # precomputed pos counts
            ],
            out_specs=pl.BlockSpec((tm, 1), lambda i, j: (i, 0)),
            scratch_shapes=[pltpu.VMEM((tm, 1), jnp.float32)] * 3,  # m, l, psum
        ),
        compiler_params=pltpu.CompilerParams(
            dimension_semantics=("parallel", "arbitrary"),
            vmem_limit_bytes=vmem_limit),
    )(anchor_p, contrast_p, rgid_p, cgid_p, pcnt_p)

    return jnp.mean(per_anchor[:m_rows, 0])


def _supcon_loss_ref(features, labels=None, temperature=TEMPERATURE,
                     base_temperature=BASE_TEMPERATURE, contrast_mode="all"):
    """Pure-JAX reference mirroring the PyTorch code."""
    bsz, n_views, d = features.shape
    if labels is None:
        base_mask = jnp.eye(bsz, dtype=jnp.float32)
    else:
        labels = labels.reshape(-1, 1)
        base_mask = (labels == labels.T).astype(jnp.float32)
    cf = jnp.concatenate([features[:, v, :] for v in range(n_views)], axis=0)
    if contrast_mode == "one":
        af = features[:, 0, :]
        anchor_count = 1
    else:
        af = cf
        anchor_count = n_views
    adc = (af @ cf.T) / temperature
    logits = adc - jnp.max(adc, axis=1, keepdims=True)
    m_rows = anchor_count * bsz
    n_cols = n_views * bsz
    mask = jnp.tile(base_mask, (anchor_count, n_views))
    logits_mask = jnp.ones((m_rows, n_cols), jnp.float32).at[
        jnp.arange(m_rows), jnp.arange(m_rows)].set(0.0)
    mask = mask * logits_mask
    exp_logits = jnp.exp(logits) * logits_mask
    log_prob = logits - jnp.log(exp_logits.sum(1, keepdims=True))
    mean_log_prob_pos = (mask * log_prob).sum(1) / mask.sum(1)
    loss = -(temperature / base_temperature) * mean_log_prob_pos
    return loss.reshape(anchor_count, bsz).mean()


if __name__ == "__main__":
    key = jax.random.PRNGKey(0)
    k1, k2 = jax.random.split(key)

    # Small shapes consistent with the module: [bsz, n_views, D].
    bsz, n_views, d = 8, 2, 32
    feats = jax.random.normal(k1, (bsz, n_views, d), dtype=jnp.float32)
    feats = feats / jnp.linalg.norm(feats, axis=-1, keepdims=True)
    labels = jnp.array([0, 1, 0, 1, 2, 2, 3, 3], dtype=jnp.int32)

    # 1) SimCLR-degenerate case (no labels / no mask), f32 tiles, tight check.
    out = jax.block_until_ready(supcon_loss(feats, compute_dtype=jnp.float32))
    ref = _supcon_loss_ref(feats)
    assert jnp.allclose(out, ref, rtol=1e-4, atol=1e-4), (out, ref)

    # 2) Supervised case with labels, f32 tiles.
    out2 = jax.block_until_ready(
        supcon_loss(feats, labels=labels, compute_dtype=jnp.float32))
    ref2 = _supcon_loss_ref(feats, labels=labels)
    assert jnp.allclose(out2, ref2, rtol=1e-4, atol=1e-4), (out2, ref2)

    # 3) contrast_mode='one', f32 tiles.
    out3 = jax.block_until_ready(
        supcon_loss(feats, labels=labels, contrast_mode="one",
                    compute_dtype=jnp.float32))
    ref3 = _supcon_loss_ref(feats, labels=labels, contrast_mode="one")
    assert jnp.allclose(out3, ref3, rtol=1e-4, atol=1e-4), (out3, ref3)

    # 4) Multi-tile path (many row tiles, 2 column tiles, padded last column
    #    tile) to exercise the online-logsumexp accumulation across grid steps.
    bsz2, nv2, d2 = 96, 2, 48
    feats2 = jax.random.normal(k2, (bsz2, nv2, d2), dtype=jnp.float32)
    feats2 = feats2 / jnp.linalg.norm(feats2, axis=-1, keepdims=True)
    labels2 = (jnp.arange(bsz2) % 7).astype(jnp.int32)
    out4 = jax.block_until_ready(
        supcon_loss(feats2, labels=labels2, compute_dtype=jnp.float32,
                    block_m=16, block_n=128))
    ref4 = _supcon_loss_ref(feats2, labels=labels2)
    assert jnp.allclose(out4, ref4, rtol=1e-4, atol=1e-4), (out4, ref4)

    # 5) Default bf16 MXU path (f32 accumulation / softmax math): loose
    #    tolerance because the similarity matmul inputs are bf16-quantized.
    out5 = jax.block_until_ready(supcon_loss(feats, labels=labels))
    assert jnp.allclose(out5, ref2, rtol=5e-2, atol=5e-2), (out5, ref2)

    print("KERNEL_OK")
</pallas_src>

<mosaic_0001>
module attributes {stable_mosaic.version = 11 : i64} {
  func.func @_supcon_kernel(%arg0: i32, %arg1: i32, %arg2: memref<8x128xf32, #tpu.memory_space<vmem>>, %arg3: memref<128x128xf32, #tpu.memory_space<vmem>>, %arg4: memref<8x1xi32, #tpu.memory_space<vmem>>, %arg5: memref<1x128xi32, #tpu.memory_space<vmem>>, %arg6: memref<8x1xf32, #tpu.memory_space<vmem>>, %arg7: memref<8x1xf32, #tpu.memory_space<vmem>>, %arg8: memref<8x1xf32, #tpu.memory_space<vmem>>, %arg9: memref<8x1xf32, #tpu.memory_space<vmem>>, %arg10: memref<8x1xf32, #tpu.memory_space<vmem>>) attributes {dimension_semantics = [#tpu.dimension_semantics<parallel>, #tpu.dimension_semantics<arbitrary>], iteration_bounds = array<i64: 2, 1>, scalar_prefetch = 0 : i64, scratch_operands = 3 : i64, tpu.core_type = #tpu.core_type<tc>, window_params = [{transform_indices = @transform_0, window_bounds = array<i64: 8, 128>}, {transform_indices = @transform_1, window_bounds = array<i64: 128, 128>}, {transform_indices = @transform_2, window_bounds = array<i64: 8, 1>}, {transform_indices = @transform_3, window_bounds = array<i64: 1, 128>}, {transform_indices = @transform_4, window_bounds = array<i64: 8, 1>}, {transform_indices = @transform_5, window_bounds = array<i64: 8, 1>}]} {
    %c0_i32 = arith.constant 0 : i32
    %0 = arith.cmpi eq, %arg1, %c0_i32 : i32
    %1 = arith.extui %0 : i1 to i32
    %c0_i32_0 = arith.constant 0 : i32
    %2 = arith.cmpi ne, %1, %c0_i32_0 : i32
    scf.if %2 {
      %cst_28 = arith.constant 0xFF800000 : f32
      %57 = vector.broadcast %cst_28 : f32 to vector<8x1xf32>
      %c0_29 = arith.constant 0 : index
      %c0_30 = arith.constant 0 : index
      %58 = vector.load %arg8[%c0_29, %c0_30] : memref<8x1xf32, #tpu.memory_space<vmem>>, vector<8x1xf32>
      tpu.vector_store %arg8[%c0_29, %c0_30], %57 {strides = array<i32>} : memref<8x1xf32, #tpu.memory_space<vmem>>, vector<8x1xf32>,
      %cst_31 = arith.constant 0.000000e+00 : f32
      %59 = vector.broadcast %cst_31 : f32 to vector<8x1xf32>
      %c0_32 = arith.constant 0 : index
      %c0_33 = arith.constant 0 : index
      %60 = vector.load %arg9[%c0_32, %c0_33] : memref<8x1xf32, #tpu.memory_space<vmem>>, vector<8x1xf32>
      tpu.vector_store %arg9[%c0_32, %c0_33], %59 {strides = array<i32>} : memref<8x1xf32, #tpu.memory_space<vmem>>, vector<8x1xf32>,
      %cst_34 = arith.constant 0.000000e+00 : f32
      %61 = vector.broadcast %cst_34 : f32 to vector<8x1xf32>
      %c0_35 = arith.constant 0 : index
      %c0_36 = arith.constant 0 : index
      %62 = vector.load %arg10[%c0_35, %c0_36] : memref<8x1xf32, #tpu.memory_space<vmem>>, vector<8x1xf32>
      tpu.vector_store %arg10[%c0_35, %c0_36], %61 {strides = array<i32>} : memref<8x1xf32, #tpu.memory_space<vmem>>, vector<8x1xf32>,
    } else {
    }
    %c0 = arith.constant 0 : index
    %c0_1 = arith.constant 0 : index
    %3 = vector.load %arg2[%c0, %c0_1] : memref<8x128xf32, #tpu.memory_space<vmem>>, vector<8x128xf32>
    %c0_2 = arith.constant 0 : index
    %c0_3 = arith.constant 0 : index
    %4 = vector.load %arg3[%c0_2, %c0_3] : memref<128x128xf32, #tpu.memory_space<vmem>>, vector<128x128xf32>
    %cst = arith.constant dense<0.000000e+00> : vector<8x128xf32>
    %5 = tpu.matmul %3, %4, %cst {dimension_numbers = #tpu.dot_dimension_numbers<[1], [1], [0], [0], [0, 0, 1, 0], [], []>} : vector<8x128xf32>, vector<128x128xf32>, vector<8x128xf32> -> vector<8x128xf32>
    %c8_i32 = arith.constant 8 : i32
    %6 = arith.muli %arg0, %c8_i32 : i32
    %7 = tpu.iota {dimensions = array<i32: 0>} : vector<8x1xi32>
    %8 = vector.broadcast %6 : i32 to vector<8x1xi32>
    %9 = arith.addi %8, %7 : vector<8x1xi32>
    %c128_i32 = arith.constant 128 : i32
    %10 = arith.muli %arg1, %c128_i32 : i32
    %11 = tpu.iota {dimensions = array<i32: 1>} : vector<1x128xi32>
    %12 = vector.broadcast %10 : i32 to vector<1x128xi32>
    %13 = arith.addi %12, %11 : vector<1x128xi32>
    %14 = vector.broadcast %9 : vector<8x1xi32> to vector<8x128xi32>
    %15 = vector.broadcast %13 : vector<1x128xi32> to vector<8x128xi32>
    %16 = arith.cmpi ne, %14, %15 : vector<8x128xi32>
    %c16_i32 = arith.constant 16 : i32
    %17 = vector.broadcast %c16_i32 : i32 to vector<1x128xi32>
    %18 = arith.cmpi slt, %13, %17 : vector<1x128xi32>
    %19 = vector.broadcast %18 : vector<1x128xi1> to vector<8x128xi1>
    %20 = arith.andi %16, %19 : vector<8x128xi1>
    %21 = arith.extui %20 : vector<8x128xi1> to vector<8x128xi32>
    %22 = arith.sitofp %21 : vector<8x128xi32> to vector<8x128xf32>
    %c0_4 = arith.constant 0 : index
    %c0_5 = arith.constant 0 : index
    %23 = vector.load %arg8[%c0_4, %c0_5] : memref<8x1xf32, #tpu.memory_space<vmem>>, vector<8x1xf32>
    %cst_6 = arith.constant dense<0xFF800000> : vector<8xf32>
    %24 = vector.multi_reduction <maximumf>, %5, %cst_6 [1] : vector<8x128xf32> to vector<8xf32>
    %25 = vector.shape_cast %24 : vector<8xf32> to vector<8x1xf32>
    %26 = arith.maximumf %23, %25 : vector<8x1xf32>
    %c0_7 = arith.constant 0 : index
    %c0_8 = arith.constant 0 : index
    %27 = vector.load %arg8[%c0_7, %c0_8] : memref<8x1xf32, #tpu.memory_space<vmem>>, vector<8x1xf32>
    %28 = arith.subf %27, %26 : vector<8x1xf32>
    %29 = math.exp %28 : vector<8x1xf32>
    %30 = vector.broadcast %26 : vector<8x1xf32> to vector<8x128xf32>
    %31 = arith.subf %5, %30 : vector<8x128xf32>
    %32 = math.exp %31 : vector<8x128xf32>
    %33 = arith.mulf %32, %22 : vector<8x128xf32>
    %c0_9 = arith.constant 0 : index
    %c0_10 = arith.constant 0 : index
    %34 = vector.load %arg9[%c0_9, %c0_10] : memref<8x1xf32, #tpu.memory_space<vmem>>, vector<8x1xf32>
    %35 = arith.mulf %29, %34 : vector<8x1xf32>
    %cst_11 = arith.constant dense<0.000000e+00> : vector<8xf32>
    %36 = vector.multi_reduction <add>, %33, %cst_11 [1] : vector<8x128xf32> to vector<8xf32>
    %37 = vector.shape_cast %36 : vector<8xf32> to vector<8x1xf32>
    %38 = arith.addf %35, %37 : vector<8x1xf32>
    %c0_12 = arith.constant 0 : index
    %c0_13 = arith.constant 0 : index
    %39 = vector.load %arg9[%c0_12, %c0_13] : memref<8x1xf32, #tpu.memory_space<vmem>>, vector<8x1xf32>
    tpu.vector_store %arg9[%c0_12, %c0_13], %38 {strides = array<i32>} : memref<8x1xf32, #tpu.memory_space<vmem>>, vector<8x1xf32>,
    %c0_14 = arith.constant 0 : index
    %c0_15 = arith.constant 0 : index
    %40 = vector.load %arg8[%c0_14, %c0_15] : memref<8x1xf32, #tpu.memory_space<vmem>>, vector<8x1xf32>
    tpu.vector_store %arg8[%c0_14, %c0_15], %26 {strides = array<i32>} : memref<8x1xf32, #tpu.memory_space<vmem>>, vector<8x1xf32>,
    %c0_16 = arith.constant 0 : index
    %c0_17 = arith.constant 0 : index
    %41 = vector.load %arg4[%c0_16, %c0_17] : memref<8x1xi32, #tpu.memory_space<vmem>>, vector<8x1xi32>
    %c0_18 = arith.constant 0 : index
    %c0_19 = arith.constant 0 : index
    %42 = vector.load %arg5[%c0_18, %c0_19] : memref<1x128xi32, #tpu.memory_space<vmem>>, vector<1x128xi32>
    %43 = vector.broadcast %41 : vector<8x1xi32> to vector<8x128xi32>
    %44 = vector.broadcast %42 : vector<1x128xi32> to vector<8x128xi32>
    %45 = arith.cmpi eq, %43, %44 : vector<8x128xi32>
    %cst_20 = arith.constant 0.000000e+00 : f32
    %46 = vector.broadcast %cst_20 : f32 to vector<8x128xf32>
    %47 = arith.select %45, %22, %46 : vector<8x128xi1>, vector<8x128xf32>
    %c0_21 = arith.constant 0 : index
    %c0_22 = arith.constant 0 : index
    %48 = vector.load %arg10[%c0_21, %c0_22] : memref<8x1xf32, #tpu.memory_space<vmem>>, vector<8x1xf32>
    %49 = arith.mulf %47, %5 : vector<8x128xf32>
    %cst_23 = arith.constant dense<0.000000e+00> : vector<8xf32>
    %50 = vector.multi_reduction <add>, %49, %cst_23 [1] : vector<8x128xf32> to vector<8xf32>
    %51 = vector.shape_cast %50 : vector<8xf32> to vector<8x1xf32>
    %52 = arith.addf %48, %51 : vector<8x1xf32>
    %c0_24 = arith.constant 0 : index
    %c0_25 = arith.constant 0 : index
    %53 = vector.load %arg10[%c0_24, %c0_25] : memref<8x1xf32, #tpu.memory_space<vmem>>, vector<8x1xf32>
    tpu.vector_store %arg10[%c0_24, %c0_25], %52 {strides = array<i32>} : memref<8x1xf32, #tpu.memory_space<vmem>>, vector<8x1xf32>,
    %c0_i32_26 = arith.constant 0 : i32
    %54 = arith.cmpi eq, %arg1, %c0_i32_26 : i32
    %55 = arith.extui %54 : i1 to i32
    %c0_i32_27 = arith.constant 0 : i32
    %56 = arith.cmpi ne, %55, %c0_i32_27 : i32
    scf.if %56 {
      %c0_28 = arith.constant 0 : index
      %c0_29 = arith.constant 0 : index
      %57 = vector.load %arg8[%c0_28, %c0_29] : memref<8x1xf32, #tpu.memory_space<vmem>>, vector<8x1xf32>
      %c0_30 = arith.constant 0 : index
      %c0_31 = arith.constant 0 : index
      %58 = vector.load %arg9[%c0_30, %c0_31] : memref<8x1xf32, #tpu.memory_space<vmem>>, vector<8x1xf32>
      %59 = math.log %58 : vector<8x1xf32>
      %60 = arith.addf %57, %59 : vector<8x1xf32>
      %c0_32 = arith.constant 0 : index
      %c0_33 = arith.constant 0 : index
      %61 = vector.load %arg10[%c0_32, %c0_33] : memref<8x1xf32, #tpu.memory_space<vmem>>, vector<8x1xf32>
      %c0_34 = arith.constant 0 : index
      %c0_35 = arith.constant 0 : index
      %62 = vector.load %arg6[%c0_34, %c0_35] : memref<8x1xf32, #tpu.memory_space<vmem>>, vector<8x1xf32>
      %63 = arith.divf %61, %62 : vector<8x1xf32>
      %64 = arith.subf %63, %60 : vector<8x1xf32>
      %cst_36 = arith.constant -1.000000e+00 : f32
      %65 = vector.broadcast %cst_36 : f32 to vector<8x1xf32>
      %66 = arith.mulf %65, %64 : vector<8x1xf32>
      %c0_37 = arith.constant 0 : index
      %c0_38 = arith.constant 0 : index
      %67 = vector.load %arg7[%c0_37, %c0_38] : memref<8x1xf32, #tpu.memory_space<vmem>>, vector<8x1xf32>
      tpu.vector_store %arg7[%c0_37, %c0_38], %66 {strides = array<i32>} : memref<8x1xf32, #tpu.memory_space<vmem>>, vector<8x1xf32>,
    } else {
    }
    return
  }
  func.func @transform_0(%arg0: i32, %arg1: i32) -> (i32, i32) {
    %c0_i32 = arith.constant 0 : i32
    %c0_i32_0 = arith.constant 0 : i32
    return %arg0, %c0_i32 : i32, i32
  }
  func.func @transform_1(%arg0: i32, %arg1: i32) -> (i32, i32) {
    %c0_i32 = arith.constant 0 : i32
    %c0_i32_0 = arith.constant 0 : i32
    return %arg1, %c0_i32 : i32, i32
  }
  func.func @transform_2(%arg0: i32, %arg1: i32) -> (i32, i32) {
    %c0_i32 = arith.constant 0 : i32
    %c0_i32_0 = arith.constant 0 : i32
    return %arg0, %c0_i32 : i32, i32
  }
  func.func @transform_3(%arg0: i32, %arg1: i32) -> (i32, i32) {
    %c0_i32 = arith.constant 0 : i32
    %c0_i32_0 = arith.constant 0 : i32
    return %c0_i32, %arg1 : i32, i32
  }
  func.func @transform_4(%arg0: i32, %arg1: i32) -> (i32, i32) {
    %c0_i32 = arith.constant 0 : i32
    %c0_i32_0 = arith.constant 0 : i32
    return %arg0, %c0_i32 : i32, i32
  }
  func.func @transform_5(%arg0: i32, %arg1: i32) -> (i32, i32) {
    %c0_i32 = arith.constant 0 : i32
    %c0_i32_0 = arith.constant 0 : i32
    return %arg0, %c0_i32 : i32, i32
  }
}

</mosaic_0001>

<llo_original>
// kernel: tpu_custom_call.1
$region0: #{tpu_custom_call.1}
  #allocation0 [shape = 'u32[]', space=smem, size = 0x4, offset = 0x4, fixed_abs, tag = 'smem constant byte address 0x4 - core index']
  #allocation1 [shape = 'u32[144,128]{1,0:T(1,128)}', space=vmem, size = 0x12000, scoped, tag = 'internal scratch']
  #allocation2 [shape = 'f32[8,1]{1,0:T(8,128)}', space=vmem, size = 0x1000, scoped, tag = 'scratch operand']
  #allocation3 [shape = 'f32[8,1]{1,0:T(8,128)}', space=vmem, size = 0x1000, scoped, tag = 'scratch operand']
  #allocation4 [shape = 'f32[8,1]{1,0:T(8,128)}', space=vmem, size = 0x1000, scoped, tag = 'scratch operand']
  %s0 = inlined_call_operand.vmem [shape: f32[16,128], index: 0, kind: input, shape index: {}]
  %s1 = inlined_call_operand.hbm [shape: f32[128,128], index: 1, kind: input, shape index: {}]
  %s2 = inlined_call_operand.vmem [shape: s32[16,1], index: 2, kind: input, shape index: {}]
  %s3 = inlined_call_operand.vmem [shape: s32[1,128], index: 3, kind: input, shape index: {}]
  %s4 = inlined_call_operand.vmem [shape: f32[16,1], index: 4, kind: input, shape index: {}]
  %s5 = inlined_call_operand.vmem [shape: f32[16,1], index: 5, kind: output, shape index: {}]
  %s6 = sld [smem:[#allocation0]]
  $region65: #{tpu_custom_call.1} parent=0
    _
  %s8 = ssub.s32 1, %s6
  %s9 = scalar_select 0, %s8, %s6
  $region1: #{tpu_custom_call.1} parent=0
    #allocation5 [shape = 'u8[65536]{0}', space=vmem, size = 0x10000, scoped, tag = 'input window, operand 1, single buffered']
    #allocation6 [shape = 's32[2]{0}', space=sflag, size = 0x8, scoped, tag = 'scoped memory for tpu_custom_call.1']
    %10 = vsyncpa [#allocation6], 0
    loop: start=0, step=1, limit=4
    $region2: #{tpu_custom_call.1} parent=1 // loop_pre_header
      _
    $region3: #{tpu_custom_call.1} parent=1 // loop_header
      %s12 = sphi 0, %s16
      %p13 = scmp.ge.s32.totalorder %s12, 4
      %s19 = sphi 0, %s31
      %s20 = sphi 0, %s27
      %s21 = sphi 0, %s19
      %s22 = sphi 0, %s20
      %s23 = sphi 0, %s21
      %s24 = sphi 0, %s22
      %s34 = sphi 0, %s36
      %s37 = sphi 0, %s34
      %s38 = sphi 0, %s37
      %s54 = sphi 0, %s38
      %s60 = sphi 0, %s62
      %s63 = sphi 0, %s60
      %s64 = sphi 0, %s63
      %s80 = sphi 0, %s64
      %s86 = sphi 0, %s88
      %s89 = sphi 0, %s86
      %s90 = sphi 0, %s89
      %s106 = sphi 0, %s90
      %s112 = sphi 0, %s114
      %s115 = sphi 0, %s112
      %s116 = sphi 0, %s115
      %s132 = sphi 0, %s116
      %s138 = sphi 0, %s140
      %s141 = sphi 0, %s138
      %s142 = sphi 0, %s141
      %s158 = sphi 0, %s142
      %s164 = sphi 0, %s166
      %s167 = sphi 0, %s164
      %s168 = sphi 0, %s167
      %s184 = sphi 0, %s168
    $region4: #{tpu_custom_call.1} parent=1 // loop_header_branch
      %15 = sbr.rel (%p13) target = $region8
    $region5: #{tpu_custom_call.1} parent=1 // loop_body
      %s17 = ssub.s32 %s12, 1
      %s18 = ssub.s32 %s12, 2
      %s25 = sadd.s32 1, %s20
      %p26 = scmp.ge.s32.totalorder %s25, 1
      %s27 = scalar_select %p26, 0, %s25
      %s28 = sadd.s32 1, %s19
      %s29 = scalar_select %p26, %s28, %s19
      %p30 = scmp.ge.s32.totalorder %s29, 2
      %s31 = scalar_select %p30, 0, %s29
      %s32 = ssub.s32 %s19, %s31
      %p33 = scmp.eq.s32.totalorder %s32, 0
      %s35 = sadd.s32 %s34, 1
      %s36 = scalar_select %p33, %s34, %s35
      %p39 = pneg %p33
      %p40 = scmp.eq.s32.totalorder %s12, 1
      %p41 = por %p39, %p40
      %p42 = scmp.ne.s32.totalorder %s34, %s37
      %p43 = scmp.eq.s32.totalorder %s12, 0
      %p44 = por %p42, %p43
      %p45 = scmp.ne.s32.totalorder %s34, %s37
      %p46 = scmp.eq.s32.totalorder %s17, 1
      %p47 = por %p45, %p46
      %p48 = scmp.ne.s32.totalorder %s37, %s38
      %p49 = scmp.eq.s32.totalorder %s17, 0
      %p50 = por %p48, %p49
      %p51 = scmp.ne.s32.totalorder %s37, %s38
      %p52 = scmp.eq.s32.totalorder %s18, 1
      %p53 = por %p51, %p52
      %p55 = scmp.ne.s32.totalorder %s38, %s54
      %p56 = scmp.eq.s32.totalorder %s18, 0
      %p57 = por %p55, %p56
      %s58 = ssub.s32 %s20, %s27
      %p59 = scmp.eq.s32.totalorder %s58, 0
      %s61 = sadd.s32 %s60, 1
      %s62 = scalar_select %p59, %s60, %s61
      %p65 = pneg %p59
      %p66 = scmp.eq.s32.totalorder %s12, 1
      %p67 = por %p65, %p66
      %p68 = scmp.ne.s32.totalorder %s60, %s63
      %p69 = scmp.eq.s32.totalorder %s12, 0
      %p70 = por %p68, %p69
      %p71 = scmp.ne.s32.totalorder %s60, %s63
      %p72 = scmp.eq.s32.totalorder %s17, 1
      %p73 = por %p71, %p72
      %p74 = scmp.ne.s32.totalorder %s63, %s64
      %p75 = scmp.eq.s32.totalorder %s17, 0
      %p76 = por %p74, %p75
      %p77 = scmp.ne.s32.totalorder %s63, %s64
      %p78 = scmp.eq.s32.totalorder %s18, 1
      %p79 = por %p77, %p78
      %p81 = scmp.ne.s32.totalorder %s64, %s80
      %p82 = scmp.eq.s32.totalorder %s18, 0
      %p83 = por %p81, %p82
      %s84 = ssub.s32 %s19, %s31
      %p85 = scmp.eq.s32.totalorder %s84, 0
      %s87 = sadd.s32 %s86, 1
      %s88 = scalar_select %p85, %s86, %s87
      %p91 = pneg %p85
      %p92 = scmp.eq.s32.totalorder %s12, 1
      %p93 = por %p91, %p92
      %p94 = scmp.ne.s32.totalorder %s86, %s89
      %p95 = scmp.eq.s32.totalorder %s12, 0
      %p96 = por %p94, %p95
      %p97 = scmp.ne.s32.totalorder %s86, %s89
      %p98 = scmp.eq.s32.totalorder %s17, 1
      %p99 = por %p97, %p98
      %p100 = scmp.ne.s32.totalorder %s89, %s90
      %p101 = scmp.eq.s32.totalorder %s17, 0
      %p102 = por %p100, %p101
      %p103 = scmp.ne.s32.totalorder %s89, %s90
      %p104 = scmp.eq.s32.totalorder %s18, 1
      %p105 = por %p103, %p104
      %p107 = scmp.ne.s32.totalorder %s90, %s106
      %p108 = scmp.eq.s32.totalorder %s18, 0
      %p109 = por %p107, %p108
      %s110 = ssub.s32 %s20, %s27
      %p111 = scmp.eq.s32.totalorder %s110, 0
      %s113 = sadd.s32 %s112, 1
      %s114 = scalar_select %p111, %s112, %s113
      %p117 = pneg %p111
      %p118 = scmp.eq.s32.totalorder %s12, 1
      %p119 = por %p117, %p118
      %p120 = scmp.ne.s32.totalorder %s112, %s115
      %p121 = scmp.eq.s32.totalorder %s12, 0
      %p122 = por %p120, %p121
      %p123 = scmp.ne.s32.totalorder %s112, %s115
      %p124 = scmp.eq.s32.totalorder %s17, 1
      %p125 = por %p123, %p124
      %p126 = scmp.ne.s32.totalorder %s115, %s116
      %p127 = scmp.eq.s32.totalorder %s17, 0
      %p128 = por %p126, %p127
      %p129 = scmp.ne.s32.totalorder %s115, %s116
      %p130 = scmp.eq.s32.totalorder %s18, 1
      %p131 = por %p129, %p130
      %p133 = scmp.ne.s32.totalorder %s116, %s132
      %p134 = scmp.eq.s32.totalorder %s18, 0
      %p135 = por %p133, %p134
      %s136 = ssub.s32 %s19, %s31
      %p137 = scmp.eq.s32.totalorder %s136, 0
      %s139 = sadd.s32 %s138, 1
      %s140 = scalar_select %p137, %s138, %s139
      %p143 = pneg %p137
      %p144 = scmp.eq.s32.totalorder %s12, 1
      %p145 = por %p143, %p144
      %p146 = scmp.ne.s32.totalorder %s138, %s141
      %p147 = scmp.eq.s32.totalorder %s12, 0
      %p148 = por %p146, %p147
      %p149 = scmp.ne.s32.totalorder %s138, %s141
      %p150 = scmp.eq.s32.totalorder %s17, 1
      %p151 = por %p149, %p150
      %p152 = scmp.ne.s32.totalorder %s141, %s142
      %p153 = scmp.eq.s32.totalorder %s17, 0
      %p154 = por %p152, %p153
      %p155 = scmp.ne.s32.totalorder %s141, %s142
      %p156 = scmp.eq.s32.totalorder %s18, 1
      %p157 = por %p155, %p156
      %p159 = scmp.ne.s32.totalorder %s142, %s158
      %p160 = scmp.eq.s32.totalorder %s18, 0
      %p161 = por %p159, %p160
      %s162 = ssub.s32 %s19, %s31
      %p163 = scmp.eq.s32.totalorder %s162, 0
      %s165 = sadd.s32 %s164, 1
      %s166 = scalar_select %p163, %s164, %s165
      %p169 = pneg %p163
      %p170 = scmp.eq.s32.totalorder %s12, 1
      %p171 = por %p169, %p170
      %p172 = scmp.ne.s32.totalorder %s164, %s167
      %p173 = scmp.eq.s32.totalorder %s12, 0
      %p174 = por %p172, %p173
      %p175 = scmp.ne.s32.totalorder %s164, %s167
      %p176 = scmp.eq.s32.totalorder %s17, 1
      %p177 = por %p175, %p176
      %p178 = scmp.ne.s32.totalorder %s167, %s168
      %p179 = scmp.eq.s32.totalorder %s17, 0
      %p180 = por %p178, %p179
      %p181 = scmp.ne.s32.totalorder %s167, %s168
      %p182 = scmp.eq.s32.totalorder %s18, 1
      %p183 = por %p181, %p182
      %p185 = scmp.ne.s32.totalorder %s168, %s184
      %p186 = scmp.eq.s32.totalorder %s18, 0
      %p187 = por %p185, %p186
      %p188 = scmp.le.s32.totalorder 1, %s12
      %p189 = scmp.lt.s32.totalorder %s12, 3
      %p190 = pnand %p188, %p189
      %p191 = pneg %p190
      // Predicated region
      $region9: #{tpu_custom_call.1} parent=5 // pred_check
        _
      $region10: #{tpu_custom_call.1} parent=5 // pred_check_branch
        %193 = sbr.rel (%p190) target = $region12
      $region11: #{tpu_custom_call.1} parent=5 // pred_region
        %s194 = ssub.s32 %s12, 1
        // Predicated region
        $region13: #{tpu_custom_call.1} parent=11 // pred_check
          %p195 = pneg %p76
        $region14: #{tpu_custom_call.1} parent=11 // pred_check_branch
          %197 = sbr.rel (%p195) target = $region16
        $region15: #{tpu_custom_call.1} parent=11 // pred_region
          %s198 = smul.u32 16, %s22
          %s200 = ssub.s32 2048, 2048
          %201 = vsyncadd [#allocation6], %s200
          %s202 = smul.addr %s198, 128
          %s203 = scalar_lea.hbm %s1, %s202
          %s204 = sshll.u32 [#allocation5], 4
          %s205 = int_to_ptr.vmem [resolvable:$true] %s204
          %210 = dma.hbm_to_vmem [thread:$0]  %s203, 2048, %s205, [#allocation6], 128, 128, 8
        $region16: #{tpu_custom_call.1} parent=11 // pred_fallthru
          _
        // Predicated region
        $region17: #{tpu_custom_call.1} parent=11 // pred_check
          %p211 = pneg %p128
        $region18: #{tpu_custom_call.1} parent=11 // pred_check_branch
          %213 = sbr.rel (%p211) target = $region20
        $region19: #{tpu_custom_call.1} parent=11 // pred_region
          %p214 = scmp.lt.s32.totalorder %s22, 0
          %s215 = scalar_select %p214, %s22, 0
          %s216 = scalar_lea.vmem %s3, %s215
        $region20: #{tpu_custom_call.1} parent=11 // pred_fallthru
          _
      $region12: #{tpu_custom_call.1} parent=5 // pred_fallthru
        _
      %p217 = scmp.lt.s32.totalorder %s12, 2
      // Predicated region
      $region21: #{tpu_custom_call.1} parent=5 // pred_check
        %p218 = pneg %p217
      $region22: #{tpu_custom_call.1} parent=5 // pred_check_branch
        %220 = sbr.rel (%p218) target = $region24
      $region23: #{tpu_custom_call.1} parent=5 // pred_region
        // Predicated region
        $region25: #{tpu_custom_call.1} parent=23 // pred_check
          %p221 = pneg %p44
        $region26: #{tpu_custom_call.1} parent=23 // pred_check_branch
          %223 = sbr.rel (%p221) target = $region28
        $region27: #{tpu_custom_call.1} parent=23 // pred_region
          %p224 = scmp.lt.s32.totalorder %s19, 1
          %s225 = scalar_select %p224, %s19, 1
          %s226 = smul.addr %s225, 8
          %s227 = scalar_lea.vmem %s0, %s226
        $region28: #{tpu_custom_call.1} parent=23 // pred_fallthru
          _
        // Predicated region
        $region29: #{tpu_custom_call.1} parent=23 // pred_check
          %p228 = pneg %p96
        $region30: #{tpu_custom_call.1} parent=23 // pred_check_branch
          %230 = sbr.rel (%p228) target = $region32
        $region31: #{tpu_custom_call.1} parent=23 // pred_region
          %p231 = scmp.lt.s32.totalorder %s19, 1
          %s232 = scalar_select %p231, %s19, 1
          %s233 = smul.addr %s232, 8
          %s234 = scalar_lea.vmem %s2, %s233
        $region32: #{tpu_custom_call.1} parent=23 // pred_fallthru
          _
        // Predicated region
        $region33: #{tpu_custom_call.1} parent=23 // pred_check
          %p235 = pneg %p148
        $region34: #{tpu_custom_call.1} parent=23 // pred_check_branch
          %237 = sbr.rel (%p235) target = $region36
        $region35: #{tpu_custom_call.1} parent=23 // pred_region
          %p238 = scmp.lt.s32.totalorder %s19, 1
          %s239 = scalar_select %p238, %s19, 1
          %s240 = smul.addr %s239, 8
          %s241 = scalar_lea.vmem %s4, %s240
        $region36: #{tpu_custom_call.1} parent=23 // pred_fallthru
          _
      $region24: #{tpu_custom_call.1} parent=5 // pred_fallthru
        _
      %p242 = scmp.le.s32.totalorder 1, %s12
      %p243 = scmp.lt.s32.totalorder %s12, 3
      %p244 = pnand %p242, %p243
      %p245 = pneg %p244
      // Predicated region
      $region37: #{tpu_custom_call.1} parent=5 // pred_check
        _
      $region38: #{tpu_custom_call.1} parent=5 // pred_check_branch
        %247 = sbr.rel (%p244) target = $region40
      $region39: #{tpu_custom_call.1} parent=5 // pred_region
        %s248 = ssub.s32 %s12, 1
        // Predicated region
        $region41: #{tpu_custom_call.1} parent=39 // pred_check
          %p249 = pneg %p76
        $region42: #{tpu_custom_call.1} parent=39 // pred_check_branch
          %251 = sbr.rel (%p249) target = $region44
        $region43: #{tpu_custom_call.1} parent=39 // pred_region
          %252 = dma.done [#allocation6], 2048
        $region44: #{tpu_custom_call.1} parent=39 // pred_fallthru
          _
        %p253 = scmp.lt.s32.totalorder %s21, 1
        %s254 = scalar_select %p253, %s21, 1
        %s255 = smul.addr %s254, 8
        %s256 = scalar_lea.vmem %s0, %s255
        %p257 = pneg %p50
        %p258 = pneg %p47
        %p259 = pneg %p76
        %p260 = pneg %p73
        %p261 = scmp.lt.s32.totalorder %s21, 1
        %s262 = scalar_select %p261, %s21, 1
        %s263 = smul.addr %s262, 8
        %s264 = scalar_lea.vmem %s2, %s263
        %p265 = pneg %p102
        %p266 = pneg %p99
        %p267 = scmp.lt.s32.totalorder %s22, 0
        %s268 = scalar_select %p267, %s22, 0
        %s269 = scalar_lea.vmem %s3, %s268
        %p270 = pneg %p128
        %p271 = pneg %p125
        %p272 = scmp.lt.s32.totalorder %s21, 1
        %s273 = scalar_select %p272, %s21, 1
        %s274 = smul.addr %s273, 8
        %s275 = scalar_lea.vmem %s4, %s274
        %p276 = pneg %p154
        %p277 = pneg %p151
        %p278 = pneg %p180
        %p279 = pneg %p177
        %p280 = scmp.lt.s32.totalorder %s21, 1
        %s281 = scalar_select %p280, %s21, 1
        %s282 = smul.addr %s281, 8
        %s283 = scalar_lea.vmem %s5, %s282
        %p284 = scmp.lt.s32.totalorder %s21, 1
        %s285 = scalar_select %p284, %s21, 1
        %s286 = smul.addr %s285, 8
        %s287 = scalar_lea.vmem %s0, %s286
        %s288 = smul.u32 16, %s22
        %p289 = scmp.lt.s32.totalorder %s21, 1
        %s290 = scalar_select %p289, %s21, 1
        %s291 = smul.addr %s290, 8
        %s292 = scalar_lea.vmem %s2, %s291
        %p293 = scmp.lt.s32.totalorder %s22, 0
        %s294 = scalar_select %p293, %s22, 0
        %s295 = scalar_lea.vmem %s3, %s294
        %p296 = scmp.lt.s32.totalorder %s21, 1
        %s297 = scalar_select %p296, %s21, 1
        %s298 = smul.addr %s297, 8
        %s299 = scalar_lea.vmem %s4, %s298
        %p300 = scmp.lt.s32.totalorder %s21, 1
        %s301 = scalar_select %p300, %s21, 1
        %s302 = smul.addr %s301, 8
        %s303 = scalar_lea.vmem %s5, %s302
        %p304 = scmp.eq.s32.totalorder %s22, 0
        // Predicated region
        $region45: #{tpu_custom_call.1} parent=39 // pred_check
          %p305 = pneg %p304
        $region46: #{tpu_custom_call.1} parent=39 // pred_check_branch
          %307 = sbr.rel (%p305) target = $region48
        $region47: #{tpu_custom_call.1} parent=39 // pred_region
          %vm308 = vcmask 7168
          %309 = vst.msk [vmem:[#allocation2] sm:$0xff] %vm308, -inf
          %310 = vst.msk [vmem:[#allocation3] sm:$0xff] %vm308, 0.0
          %311 = vst.msk [vmem:[#allocation4] sm:$0xff] %vm308, 0.0
        $region48: #{tpu_custom_call.1} parent=39 // pred_fallthru
          _
        %v312 = vld [vmem:[%s287] sm:$0xff]
        %v313 = vld [vmem:[#allocation5] sm:$0xff]
        %v314 = vld [vmem:[#allocation5 + $0x8] sm:$0xff]
        %v315 = vld [vmem:[#allocation5 + $0x10] sm:$0xff]
        %v316 = vld [vmem:[#allocation5 + $0x18] sm:$0xff]
        %v317 = vld [vmem:[#allocation5 + $0x20] sm:$0xff]
        %v318 = vld [vmem:[#allocation5 + $0x28] sm:$0xff]
        %v319 = vld [vmem:[#allocation5 + $0x30] sm:$0xff]
        %v320 = vld [vmem:[#allocation5 + $0x38] sm:$0xff]
        %v321 = vld [vmem:[#allocation5 + $0x40] sm:$0xff]
        %v322 = vld [vmem:[#allocation5 + $0x48] sm:$0xff]
        %v323 = vld [vmem:[#allocation5 + $0x50] sm:$0xff]
        %v324 = vld [vmem:[#allocation5 + $0x58] sm:$0xff]
        %v325 = vld [vmem:[#allocation5 + $0x60] sm:$0xff]
        %v326 = vld [vmem:[#allocation5 + $0x68] sm:$0xff]
        %v327 = vld [vmem:[#allocation5 + $0x70] sm:$0xff]
        %v328 = vld [vmem:[#allocation5 + $0x78] sm:$0xff]
        %329 = vmatprep.subr.mxu0 0.0
        %330 = vmatpush1.xpose.msra.mxu0 %v328
        %331 = vmatprep.subr.mxu0 0.0
        %332 = vmatpush1.xpose.msra.mxu0 %v327
        %333 = vmatprep.subr.mxu0 0.0
        %334 = vmatpush1.xpose.msra.mxu0 %v326
        %335 = vmatprep.subr.mxu0 0.0
        %336 = vmatpush1.xpose.msra.mxu0 %v325
        %337 = vmatprep.subr.mxu0 0.0
        %338 = vmatpush1.xpose.msra.mxu0 %v324
        %339 = vmatprep.subr.mxu0 0.0
        %340 = vmatpush1.xpose.msra.mxu0 %v323
        %341 = vmatprep.subr.mxu0 0.0
        %342 = vmatpush1.xpose.msra.mxu0 %v322
        %343 = vmatprep.subr.mxu0 0.0
        %344 = vmatpush1.xpose.msra.mxu0 %v321
        %345 = vmatprep.subr.mxu0 0.0
        %346 = vmatpush1.xpose.msra.mxu0 %v320
        %347 = vmatprep.subr.mxu0 0.0
        %348 = vmatpush1.xpose.msra.mxu0 %v319
        %349 = vmatprep.subr.mxu0 0.0
        %350 = vmatpush1.xpose.msra.mxu0 %v318
        %351 = vmatprep.subr.mxu0 0.0
        %352 = vmatpush1.xpose.msra.mxu0 %v317
        %353 = vmatprep.subr.mxu0 0.0
        %354 = vmatpush1.xpose.msra.mxu0 %v316
        %355 = vmatprep.subr.mxu0 0.0
        %356 = vmatpush1.xpose.msra.mxu0 %v315
        %357 = vmatprep.subr.mxu0 0.0
        %358 = vmatpush1.xpose.msra.mxu0 %v314
        %359 = vmatprep.subr.mxu0 0.0
        %360 = vmatpush1.xpose.msra.mxu0 %v313
        %361 = vmatprep.subr.mxu0 0.0
        %362 = vmatpush2.xpose.msra.mxu0 0.0
        %363 = vmatprep.subr.mxu0 0.0
        %364 = vmatpush2.xpose.msra.mxu0 0.0
        %365 = vmatprep.subr.mxu0 0.0
        %366 = vmatpush2.xpose.msra.mxu0 0.0
        %367 = vmatprep.subr.mxu0 0.0
        %368 = vmatpush2.xpose.msra.mxu0 0.0
        %369 = vmatprep.subr.mxu0 0.0
        %370 = vmatpush2.xpose.msra.mxu0 0.0
        %371 = vmatprep.subr.mxu0 0.0
        %372 = vmatpush2.xpose.msra.mxu0 0.0
        %373 = vmatprep.subr.mxu0 0.0
        %374 = vmatpush2.xpose.msra.mxu0 0.0
        %375 = vmatprep.subr.mxu0 0.0
        %376 = vmatpush2.xpose.msra.mxu0 0.0
        %377 = vmatprep.subr.mxu0 0.0
        %378 = vmatpush2.xpose.msra.mxu0 0.0
        %379 = vmatprep.subr.mxu0 0.0
        %380 = vmatpush2.xpose.msra.mxu0 0.0
        %381 = vmatprep.subr.mxu0 0.0
        %382 = vmatpush2.xpose.msra.mxu0 0.0
        %383 = vmatprep.subr.mxu0 0.0
        %384 = vmatpush2.xpose.msra.mxu0 0.0
        %385 = vmatprep.subr.mxu0 0.0
        %386 = vmatpush2.xpose.msra.mxu0 0.0
        %387 = vmatprep.subr.mxu0 0.0
        %388 = vmatpush2.xpose.msra.mxu0 0.0
        %389 = vmatprep.subr.mxu0 0.0
        %390 = vmatpush2.xpose.msra.mxu0 0.0
        %391 = vmatprep.subr.mxu0 0.0
        %392 = vmatpush2.xpose.msra.mxu0 0.0
        %393 = vmatprep.mubr.f32.mxu0 0.0
        %394 = vmatmul.mubr.f32.gmra.mxu0 %v312
        %v395 = vpop.f32.mrf.mxu0
        %v396 = vadd.f32 0.0, %v395
        %v397 = vpop.f32.mrf.mxu0
        %398 = vdwg.mxu0
        %s399 = smul.u32 %s21, 8
        %v400 = vlaneseq
        %v401 = vshrl.u32 %v400, 7
        %v402 = vstv %s399
        %v403 = vadd.s32 %v402, %v401
        %s404 = smul.u32 %s22, 128
        %v405 = vlaneseq
        %v406 = vand.u32 %v405, 127
        %v407 = vstv %s404
        %v408 = vadd.s32 %v407, %v406
        %vm409 = vcmp.ne.s32.totalorder %v403, %v408
        %vm410 = vcmp.lt.s32.totalorder %v408, 16
        %v411 = vsel %vm410, 1, 0
        %vm412 = vcmp.eq.s32.totalorder %v411, 1
        %vm413 = vmand %vm409, %vm412
        %v414 = vsel %vm413, 1, 0
        %v415 = vcvt.s32.f32 %v414
        %v416 = vld [vmem:[#allocation2] sm:$0xff]
        %417 = vmax.xlane.f32.xlu0 %v396
        %v418 = vpop.xlane.xlu0 %417
        %v419 = vmax.f32 %v416, %v418
        %v420 = vsub.f32 %v416, %v419
        %v421 = vmul.f32 %v420, 1.442695
        %v422 = vpow.pop %v421
        %424 = vset.pattern.permute.xlu0 0
        %425 = vperm.xlu0 %424, %v419
        %v426 = vpop.permute.xlu0 %425
        %v428 = vsub.f32 %v396, %v426
        %v429 = vmul.f32 %v428, 1.442695
        %v430 = vpow.pop %v429
        %v431 = vmul.f32 %v430, %v415
        %v432 = vld [vmem:[#allocation3] sm:$0xff]
        %v433 = vmul.f32 %v422, %v432
        %434 = vadd.xlane.f32.xlu0 %v431
        %v435 = vpop.xlane.xlu0 %434
        %v436 = vadd.f32 %v433, %v435
        %vm437 = vcmask 7168
        %438 = vst.msk [vmem:[#allocation3] sm:$0xff] %vm437, %v436
        %439 = vst.msk [vmem:[#allocation2] sm:$0xff] %vm437, %v419
        %v440 = vld [vmem:[%s292] sm:$0xff]
        %v441 = vld [vmem:[%s295] sm:$0x1]
        %442 = vset.pattern.permute.xlu0 0
        %443 = vperm.xlu0 %442, %v440
        %v444 = vpop.permute.xlu0 %443
        %v445 = vlaneseq
        %v446 = vshrl.u32 %v445, 7
        %v447 = vsub.s32 0, %v446
        %v448 = vrot.slane %v441, %v447
        %vm449 = vcmp.eq.s32.totalorder %v444, %v448
        %v450 = vsel %vm449, %v415, 0.0
        %v451 = vld [vmem:[#allocation4] sm:$0xff]
        %v452 = vmul.f32 %v450, %v396
        %453 = vadd.xlane.f32.xlu0 %v452
        %v454 = vpop.xlane.xlu0 %453
        %v455 = vadd.f32 %v451, %v454
        %456 = vst.msk [vmem:[#allocation4] sm:$0xff] %vm437, %v455
        // Predicated region
        $region49: #{tpu_custom_call.1} parent=39 // pred_check
          %p457 = pneg %p304
        $region50: #{tpu_custom_call.1} parent=39 // pred_check_branch
          %459 = sbr.rel (%p457) target = $region52
        $region51: #{tpu_custom_call.1} parent=39 // pred_region
          %v460 = vld [vmem:[#allocation2] sm:$0xff]
          %v461 = vld [vmem:[#allocation3] sm:$0xff]
          %v462 = vlog2.pop %v461
          %v463 = vmul.f32 %v462, 0.6931472
          %v464 = vadd.f32 %v460, %v463
          %v465 = vld [vmem:[#allocation4] sm:$0xff]
          %v466 = vld [vmem:[%s299] sm:$0xff]
          %v467 = vrcp.pop %v466
          %v468 = vmul.f32 %v465, %v467
          %v469 = vsub.f32 %v468, %v464
          %v470 = vmul.f32 %v469, -1.0
          %471 = vst.msk [vmem:[%s303] sm:$0xff] %vm437, %v470
        $region52: #{tpu_custom_call.1} parent=39 // pred_fallthru
          _
        %p472 = scmp.lt.s32.totalorder %s21, 1
        %s473 = scalar_select %p472, %s21, 1
        %s474 = smul.addr %s473, 8
        %s475 = scalar_lea.vmem %s5, %s474
        // Predicated region
        $region53: #{tpu_custom_call.1} parent=39 // pred_check
          %p476 = pneg %p177
        $region54: #{tpu_custom_call.1} parent=39 // pred_check_branch
          %478 = sbr.rel (%p476) target = $region56
        $region55: #{tpu_custom_call.1} parent=39 // pred_region
          _
        $region56: #{tpu_custom_call.1} parent=39 // pred_fallthru
          _
      $region40: #{tpu_custom_call.1} parent=5 // pred_fallthru
        _
      %p479 = scmp.le.s32.totalorder 2, %s12
      // Predicated region
      $region57: #{tpu_custom_call.1} parent=5 // pred_check
        %p480 = pneg %p479
      $region58: #{tpu_custom_call.1} parent=5 // pred_check_branch
        %482 = sbr.rel (%p480) target = $region60
      $region59: #{tpu_custom_call.1} parent=5 // pred_region
        %s483 = ssub.s32 %s12, 2
        // Predicated region
        $region61: #{tpu_custom_call.1} parent=59 // pred_check
          %p484 = pneg %p183
        $region62: #{tpu_custom_call.1} parent=59 // pred_check_branch
          %486 = sbr.rel (%p484) target = $region64
        $region63: #{tpu_custom_call.1} parent=59 // pred_region
          %p487 = scmp.lt.s32.totalorder %s23, 1
          %s488 = scalar_select %p487, %s23, 1
          %s489 = smul.addr %s488, 8
          %s490 = scalar_lea.vmem %s5, %s489
        $region64: #{tpu_custom_call.1} parent=59 // pred_fallthru
          _
      $region60: #{tpu_custom_call.1} parent=5 // pred_fallthru
        _
    $region6: #{tpu_custom_call.1} parent=1 // loop_footer
      %s16 = sadd.s32 1, %s12
    $region7: #{tpu_custom_call.1} parent=1 // loop_footer_branch
      %11 = sbr.rel target = $region3
    $region8: #{tpu_custom_call.1} parent=1 // loop_exit
      _
    %491 = vsyncpa [#allocation6], 1
    %s492 = scalar_lea.sflag [#allocation6], 1
    %493 = vsyncpa %s492, 1

</llo_original>
